<compile_context>
chip_gen: v5e
topology: v5e:2x2
jax: 0.10.0
libtpu: 0.0.40
codegen_flags: <defaults>
</compile_context>

<pallas_src>
import jax
import jax.numpy as jnp
from jax.experimental import pallas as pl
from jax.experimental.pallas import tpu as pltpu

N = 16       # number of graph nodes
F_IN = 4     # node_features
D = 32       # output_size (hidden size)
LANE = 128   # lane-tile width used for padded parameter layouts


# ====================== specialized kernel: H == 0 (module path) =====================
def gconvgru_h0_kernel(x_ref, l_ref, w_ref, p_ref, y_ref):
    """GConvGRU step with H == 0 (MY_GConvGRU_'s only path) + ReLU + Linear head.

    x_ref : (R, F_IN)       f32   R node rows (R = timesteps_in_block * N when batched)
    l_ref : (R, R)          f32   block-diagonal scaled Chebyshev Laplacian kron(I, L_hat)
    w_ref : (2, F_IN, 128)  bf16  [k][:, 0:32]=Wx_k_z, [:, 32:64]=Wx_k_h, rest 0
    p_ref : (3, 128)        f32   row0=[bz_fold|bh_fold|0], row1=[wlin|0], row2=blin
    y_ref : (R, 1)          f32
    """
    x32 = x_ref[...]
    xb = x32.astype(jnp.bfloat16)
    # L_hat @ X first (f32, only F_IN output lanes): far less MXU work than
    # L_hat @ (X @ W1) and no re-quantization of an f32 accumulation back to bf16.
    lxb = jnp.dot(l_ref[...], x32, preferred_element_type=jnp.float32).astype(jnp.bfloat16)
    pre = (jnp.dot(xb, w_ref[0], preferred_element_type=jnp.float32)
           + jnp.dot(lxb, w_ref[1], preferred_element_type=jnp.float32)
           + p_ref[0:1, :])                               # (R, 128) = [pre_z | pre_h | 0]
    z = jax.nn.sigmoid(pre[:, 0:D])                       # update gate
    h_tilde = jnp.tanh(pre[:, D:2 * D])                   # candidate (H*R == 0)
    h_new = (1.0 - z) * h_tilde                           # H' = Z*0 + (1-Z)*H~
    # Head: Linear(relu(H')) as VPU multiply + lane reduce (no 1-lane MXU pass).
    y = jnp.sum(jnp.maximum(h_new, 0.0) * p_ref[1:2, 0:D], axis=-1, keepdims=True)
    y_ref[...] = y + p_ref[2:3, 0:1]


def _gconvgru_h0_call(x_rows, l_block, sp_h0, rows_per_block):
    """One pallas_call over all node rows; grid over row blocks (parallel on v7x)."""
    rows = x_rows.shape[0]
    assert rows % rows_per_block == 0
    grid = (rows // rows_per_block,)
    return pl.pallas_call(
        gconvgru_h0_kernel,
        out_shape=jax.ShapeDtypeStruct((rows, 1), jnp.float32),
        grid=grid,
        in_specs=[
            pl.BlockSpec((rows_per_block, F_IN), lambda i: (i, 0)),
            pl.BlockSpec((rows_per_block, rows_per_block), lambda i: (0, 0)),
            pl.BlockSpec((2, F_IN, LANE), lambda i: (0, 0, 0)),
            pl.BlockSpec((3, LANE), lambda i: (0, 0)),
        ],
        out_specs=pl.BlockSpec((rows_per_block, 1), lambda i: (i, 0)),
        compiler_params=pltpu.CompilerParams(dimension_semantics=("parallel",)),
    )(x_rows, l_block, sp_h0["w01"], sp_h0["p"])


def my_gconvgru_forward(x, edge_index, edge_weight, h_, c, sp_h0, lhat=None):
    """Mirrors MY_GConvGRU_.forward: h_ / c accepted but unused; GConvGRU H=None -> 0.

    Pass a precomputed `lhat` when the graph is static across timesteps (avoids
    rebuilding the dense Laplacian every forward)."""
    del h_, c
    n = x.shape[0]
    if lhat is None:
        lhat = scaled_chebyshev_laplacian(edge_index, edge_weight, n)
    y = _gconvgru_h0_call(x.astype(jnp.float32), lhat, sp_h0, n)
    return y, None, None


def my_gconvgru_forward_batched(x_seq, edge_index, edge_weight, sp_h0, steps_per_block=8):
    """T independent snapshots (H resets every call in this module) in ONE pallas_call.

    Rows are flattened to (T*N, F); each grid block processes steps_per_block timesteps
    (steps_per_block*N = 128 MXU-friendly rows) against a block-diagonal L_hat."""
    t, n, f = x_seq.shape
    lhat = scaled_chebyshev_laplacian(edge_index, edge_weight, n)     # built once
    t_pad = ((t + steps_per_block - 1) // steps_per_block) * steps_per_block
    x_rows = jnp.zeros((t_pad * n, f), jnp.float32).at[:t * n].set(
        x_seq.reshape(t * n, f).astype(jnp.float32))
    l_block = jnp.kron(jnp.eye(steps_per_block, dtype=jnp.float32), lhat)
    y = _gconvgru_h0_call(x_rows, l_block, sp_h0, steps_per_block * n)
    return y[:t * n].reshape(t, n, 1)


# ===================== generic kernel: arbitrary H (validation only) ==================
def gconvgru_general_kernel(xh_ref, h_ref, lhat_ref, w01_ref, b_ref, wc01_ref,
                            wlin_ref, blin_ref, y_ref):
    """Full GConvGRU step (arbitrary H) + ReLU + Linear. Kept only to validate the
    complete GRU math; the PyTorch module never reaches this path (H is always 0)."""
    xh = xh_ref[...]                         # (N, F+D) bf16
    h = h_ref[...]                           # (N, D)   f32
    lhat = lhat_ref[...]                     # (N, N)   bf16

    g = jnp.dot(xh, w01_ref[...], preferred_element_type=jnp.float32)        # (N, 6D)
    lg = jnp.dot(lhat, g[:, 3 * D:].astype(jnp.bfloat16),
                 preferred_element_type=jnp.float32)                         # (N, 3D)
    pre = g[:, :3 * D] + lg + b_ref[...]

    z = jax.nn.sigmoid(pre[:, 0 * D:1 * D])
    r = jax.nn.sigmoid(pre[:, 1 * D:2 * D])

    hr = (h * r).astype(jnp.bfloat16)
    c = jnp.dot(hr, wc01_ref[...], preferred_element_type=jnp.float32)       # (N, 2D)
    lc = jnp.dot(lhat, c[:, D:].astype(jnp.bfloat16),
                 preferred_element_type=jnp.float32)                         # (N, D)
    h_tilde = jnp.tanh(pre[:, 2 * D:3 * D] + c[:, :D] + lc)

    h_new = z * h + (1.0 - z) * h_tilde
    y = jnp.sum(jnp.maximum(h_new, 0.0) * wlin_ref[...], axis=-1,
                keepdims=True) + blin_ref[0, 0]
    y_ref[...] = y


def gconvgru_general_pallas(x, lhat, h, sp):
    xh = jnp.concatenate([x, h], axis=-1).astype(jnp.bfloat16)
    vmem = pl.BlockSpec(memory_space=pltpu.MemorySpace.VMEM)
    smem = pl.BlockSpec(memory_space=pltpu.MemorySpace.SMEM)
    return pl.pallas_call(
        gconvgru_general_kernel,
        out_shape=jax.ShapeDtypeStruct((x.shape[0], 1), jnp.float32),
        in_specs=[vmem, vmem, vmem, vmem, vmem, vmem, vmem, smem],
        out_specs=vmem,
    )(xh, h, lhat.astype(jnp.bfloat16),
      sp["w01"], sp["b_main"], sp["wc01"], sp["wlin"], sp["blin"])


# ---------------------- graph preprocessing (plain-JAX glue) -------------------------
def scaled_chebyshev_laplacian(edge_index, edge_weight, num_nodes, lambda_max=2.0):
    """Dense L_hat exactly as PyG ChebConv.__norm__ (normalization='sym').
    Dense orientation: out[i] = sum_{e: target(e)==i} norm[e] * x[source(e)]."""
    row, col = edge_index[0], edge_index[1]             # row = source, col = target
    not_self = row != col
    w = jnp.where(not_self, edge_weight, 0.0)

    deg = jnp.zeros((num_nodes,), jnp.float32).at[row].add(w)
    deg_safe = jnp.where(deg > 0, deg, 1.0)
    deg_inv_sqrt = jnp.where(deg > 0, deg_safe ** -0.5, 0.0)

    w_norm = deg_inv_sqrt[row] * w * deg_inv_sqrt[col]
    lhat = jnp.zeros((num_nodes, num_nodes), jnp.float32).at[col, row].add(
        -(2.0 / lambda_max) * w_norm)
    lhat = lhat + ((2.0 / lambda_max) - 1.0) * jnp.eye(num_nodes, dtype=jnp.float32)
    return lhat


# ------------------------------- parameter handling ----------------------------------
def init_raw_params(key):
    """Raw per-ChebConv parameters (W0, W1, bias) for the six convs + Linear head."""
    ks = jax.random.split(key, 20)
    s = 0.1
    mk = lambda k, shape: s * jax.random.normal(k, shape, jnp.float32)
    raw, i = {}, 0
    for gate in ("z", "r", "h"):
        raw[f"wx0_{gate}"] = mk(ks[i], (F_IN, D)); i += 1
        raw[f"wx1_{gate}"] = mk(ks[i], (F_IN, D)); i += 1
        raw[f"bx_{gate}"] = mk(ks[i], (1, D)); i += 1
        raw[f"wh0_{gate}"] = mk(ks[i], (D, D)); i += 1
        raw[f"wh1_{gate}"] = mk(ks[i], (D, D)); i += 1
        raw[f"bh_{gate}"] = mk(ks[i], (1, D)); i += 1
    raw["wlin"] = mk(ks[18], (1, D))
    raw["blin"] = mk(ks[19], (1, 1))
    return raw


def stack_params_h0(raw):
    """Trace-time stacking for the H==0 specialized kernel (r gate & H-side convs drop;
    their biases fold in). Groups padded to 128-lane boundaries; small f32 params merged."""
    w0 = jnp.zeros((F_IN, LANE), jnp.float32)
    w0 = w0.at[:, 0:D].set(raw["wx0_z"]).at[:, D:2 * D].set(raw["wx0_h"])
    w1 = jnp.zeros((F_IN, LANE), jnp.float32)
    w1 = w1.at[:, 0:D].set(raw["wx1_z"]).at[:, D:2 * D].set(raw["wx1_h"])
    w01 = jnp.stack([w0, w1], axis=0).astype(jnp.bfloat16)             # (2, F, 128)

    p = jnp.zeros((3, LANE), jnp.float32)
    p = p.at[0, 0:D].set((raw["bx_z"] + raw["bh_z"])[0])                # folded z bias
    p = p.at[0, D:2 * D].set((raw["bx_h"] + raw["bh_h"])[0])            # folded h bias
    p = p.at[1, 0:D].set(raw["wlin"][0])                                # Linear weight
    p = p.at[2, :].set(raw["blin"][0, 0])                               # Linear bias
    return {"w01": w01, "p": p}


def stack_params_general(raw):
    """Stacking / bias folding for the generic (arbitrary-H) kernel."""
    zD = jnp.zeros((D, D), jnp.float32)
    top = jnp.concatenate([raw["wx0_z"], raw["wx0_r"], raw["wx0_h"],
                           raw["wx1_z"], raw["wx1_r"], raw["wx1_h"]], axis=1)  # (F, 6D)
    bot = jnp.concatenate([raw["wh0_z"], raw["wh0_r"], zD,
                           raw["wh1_z"], raw["wh1_r"], zD], axis=1)            # (D, 6D)
    w01 = jnp.concatenate([top, bot], axis=0).astype(jnp.bfloat16)             # (F+D, 6D)
    b_main = jnp.concatenate([raw["bx_z"] + raw["bh_z"],
                              raw["bx_r"] + raw["bh_r"],
                              raw["bx_h"] + raw["bh_h"]], axis=1)              # (1, 3D)
    wc01 = jnp.concatenate([raw["wh0_h"], raw["wh1_h"]],
                           axis=1).astype(jnp.bfloat16)                        # (D, 2D)
    return {"w01": w01, "b_main": b_main, "wc01": wc01,
            "wlin": raw["wlin"], "blin": raw["blin"]}


# ------------------------------- pure-JAX references ----------------------------------
def reference_f32(x, lhat, h, raw):
    """Literal GConvGRU + head in float32 from the raw per-conv parameters (the spec)."""
    def cheb(inp, w0, w1, b):
        return inp @ w0 + (lhat @ inp) @ w1 + b
    z = jax.nn.sigmoid(cheb(x, raw["wx0_z"], raw["wx1_z"], raw["bx_z"])
                       + cheb(h, raw["wh0_z"], raw["wh1_z"], raw["bh_z"]))
    r = jax.nn.sigmoid(cheb(x, raw["wx0_r"], raw["wx1_r"], raw["bx_r"])
                       + cheb(h, raw["wh0_r"], raw["wh1_r"], raw["bh_r"]))
    h_tilde = jnp.tanh(cheb(x, raw["wx0_h"], raw["wx1_h"], raw["bx_h"])
                       + cheb(h * r, raw["wh0_h"], raw["wh1_h"], raw["bh_h"]))
    h_new = z * h + (1.0 - z) * h_tilde
    return jnp.maximum(h_new, 0.0) @ raw["wlin"].T + raw["blin"][0, 0]


def reference_general_matched(x, lhat, h, sp):
    """Same math as the generic kernel (incl. bf16 operand casts) in plain JAX."""
    xh = jnp.concatenate([x, h], axis=-1).astype(jnp.bfloat16)
    lhat_b = lhat.astype(jnp.bfloat16)
    g = jnp.dot(xh, sp["w01"], preferred_element_type=jnp.float32)
    lg = jnp.dot(lhat_b, g[:, 3 * D:].astype(jnp.bfloat16),
                 preferred_element_type=jnp.float32)
    pre = g[:, :3 * D] + lg + sp["b_main"]
    z = jax.nn.sigmoid(pre[:, 0 * D:1 * D])
    r = jax.nn.sigmoid(pre[:, 1 * D:2 * D])
    hr = (h * r).astype(jnp.bfloat16)
    c = jnp.dot(hr, sp["wc01"], preferred_element_type=jnp.float32)
    lc = jnp.dot(lhat_b, c[:, D:].astype(jnp.bfloat16),
                 preferred_element_type=jnp.float32)
    h_tilde = jnp.tanh(pre[:, 2 * D:3 * D] + c[:, :D] + lc)
    h_new = z * h + (1.0 - z) * h_tilde
    return (jnp.sum(jnp.maximum(h_new, 0.0) * sp["wlin"], axis=-1, keepdims=True)
            + sp["blin"][0, 0])


if __name__ == "__main__":
    key = jax.random.PRNGKey(0)
    k_x, k_seq, k_w, k_p, k_h = jax.random.split(key, 5)

    # inputs (node-major [num_nodes, num_features], like PyG)
    x = jax.random.normal(k_x, (N, F_IN), jnp.float32)
    h_unused = jax.random.normal(k_h, (N, D), jnp.float32)   # ignored by the module
    c_unused = jnp.zeros((N, D), jnp.float32)                # ignored by the module

    # small symmetric ring graph with positive weights (deterministic)
    src = jnp.arange(N, dtype=jnp.int32)
    dst = (src + 1) % N
    edge_index = jnp.stack([jnp.concatenate([src, dst]),
                            jnp.concatenate([dst, src])], axis=0)            # (2, 2N)
    ew_half = jnp.abs(jax.random.normal(k_w, (N,), jnp.float32)) + 0.1
    edge_weight = jnp.concatenate([ew_half, ew_half])                        # (2N,)

    raw = init_raw_params(k_p)
    sp_h0 = stack_params_h0(raw)
    sp_gen = stack_params_general(raw)
    lhat = scaled_chebyshev_laplacian(edge_index, edge_weight, N)
    h0 = jnp.zeros((N, D), jnp.float32)

    # --- module forward (matches MY_GConvGRU_.forward: H resets to zeros) -------------
    y, h_none, c_none = my_gconvgru_forward(x, edge_index, edge_weight,
                                            h_unused, c_unused, sp_h0)
    y = jax.block_until_ready(y)
    assert y.shape == (N, 1) and h_none is None and c_none is None
    assert jnp.allclose(y, reference_f32(x, lhat, h0, raw), atol=5e-2, rtol=5e-2)

    # --- batched: 16 independent snapshots in ONE pallas_call (grid over time blocks) -
    T = 16
    x_seq = jax.random.normal(k_seq, (T, N, F_IN), jnp.float32)
    yb = jax.block_until_ready(
        my_gconvgru_forward_batched(x_seq, edge_index, edge_weight, sp_h0,
                                    steps_per_block=8))
    assert yb.shape == (T, N, 1)
    y_single = jnp.stack([my_gconvgru_forward(x_seq[t], edge_index, edge_weight,
                                              None, None, sp_h0, lhat=lhat)[0]
                          for t in range(T)])
    assert jnp.allclose(yb, y_single, atol=1e-4, rtol=1e-4)
    yb_ref = jnp.stack([reference_f32(x_seq[t], lhat, h0, raw) for t in range(T)])
    assert jnp.allclose(yb, yb_ref, atol=5e-2, rtol=5e-2)

    # --- generic-H kernel kept only to validate the full GRU math (nonzero H) ---------
    y2 = jax.block_until_ready(gconvgru_general_pallas(x, lhat, h_unused, sp_gen))
    assert jnp.allclose(y2, reference_general_matched(x, lhat, h_unused, sp_gen),
                        atol=1e-4, rtol=1e-4)
    assert jnp.allclose(y2, reference_f32(x, lhat, h_unused, raw), atol=5e-2, rtol=5e-2)

    print("KERNEL_OK")
</pallas_src>

<mosaic_0001>
module attributes {stable_mosaic.version = 11 : i64} {
  func.func @gconvgru_h0_kernel(%arg0: i32, %arg1: memref<16x4xf32, #tpu.memory_space<vmem>>, %arg2: memref<16x16xf32, #tpu.memory_space<vmem>>, %arg3: memref<2x4x128xbf16, #tpu.memory_space<vmem>>, %arg4: memref<3x128xf32, #tpu.memory_space<vmem>>, %arg5: memref<16x1xf32, #tpu.memory_space<vmem>>) attributes {dimension_semantics = [#tpu.dimension_semantics<parallel>], iteration_bounds = array<i64: 1>, scalar_prefetch = 0 : i64, scratch_operands = 0 : i64, tpu.core_type = #tpu.core_type<tc>, window_params = [{transform_indices = @transform_0, window_bounds = array<i64: 16, 4>}, {pipeline_mode = #tpu.pipeline_mode<synchronous>, transform_indices = @transform_1, window_bounds = array<i64: 16, 16>}, {pipeline_mode = #tpu.pipeline_mode<synchronous>, transform_indices = @transform_2, window_bounds = array<i64: 2, 4, 128>}, {pipeline_mode = #tpu.pipeline_mode<synchronous>, transform_indices = @transform_3, window_bounds = array<i64: 3, 128>}, {transform_indices = @transform_4, window_bounds = array<i64: 16, 1>}]} {
    %c0 = arith.constant 0 : index
    %c0_0 = arith.constant 0 : index
    %0 = vector.load %arg1[%c0, %c0_0] : memref<16x4xf32, #tpu.memory_space<vmem>>, vector<16x4xf32>
    %1 = arith.truncf %0 : vector<16x4xf32> to vector<16x4xbf16>
    %c0_1 = arith.constant 0 : index
    %c0_2 = arith.constant 0 : index
    %2 = vector.load %arg2[%c0_1, %c0_2] : memref<16x16xf32, #tpu.memory_space<vmem>>, vector<16x16xf32>
    %cst = arith.constant dense<0.000000e+00> : vector<16x4xf32>
    %3 = tpu.matmul %2, %0, %cst {dimension_numbers = #tpu.dot_dimension_numbers<[1], [0], [0], [1], [0, 0, 1, 1], [], []>} : vector<16x16xf32>, vector<16x4xf32>, vector<16x4xf32> -> vector<16x4xf32>
    %4 = arith.truncf %3 : vector<16x4xf32> to vector<16x4xbf16>
    %c0_3 = arith.constant 0 : index
    %c0_4 = arith.constant 0 : index
    %c0_5 = arith.constant 0 : index
    %5 = vector.load %arg3[%c0_3, %c0_4, %c0_5] : memref<2x4x128xbf16, #tpu.memory_space<vmem>>, vector<1x4x128xbf16>
    %6 = vector.shape_cast %5 : vector<1x4x128xbf16> to vector<4x128xbf16>
    %cst_6 = arith.constant dense<0.000000e+00> : vector<16x128xf32>
    %7 = tpu.matmul %1, %6, %cst_6 {dimension_numbers = #tpu.dot_dimension_numbers<[1], [0], [0], [1], [0, 0, 1, 1], [], []>} : vector<16x4xbf16>, vector<4x128xbf16>, vector<16x128xf32> -> vector<16x128xf32>
    %c1 = arith.constant 1 : index
    %c0_7 = arith.constant 0 : index
    %c0_8 = arith.constant 0 : index
    %8 = vector.load %arg3[%c1, %c0_7, %c0_8] : memref<2x4x128xbf16, #tpu.memory_space<vmem>>, vector<1x4x128xbf16>
    %9 = vector.shape_cast %8 : vector<1x4x128xbf16> to vector<4x128xbf16>
    %cst_9 = arith.constant dense<0.000000e+00> : vector<16x128xf32>
    %10 = tpu.matmul %4, %9, %cst_9 {dimension_numbers = #tpu.dot_dimension_numbers<[1], [0], [0], [1], [0, 0, 1, 1], [], []>} : vector<16x4xbf16>, vector<4x128xbf16>, vector<16x128xf32> -> vector<16x128xf32>
    %11 = arith.addf %7, %10 : vector<16x128xf32>
    %c0_10 = arith.constant 0 : index
    %c0_11 = arith.constant 0 : index
    %12 = vector.load %arg4[%c0_10, %c0_11] : memref<3x128xf32, #tpu.memory_space<vmem>>, vector<1x128xf32>
    %13 = vector.broadcast %12 : vector<1x128xf32> to vector<16x128xf32>
    %14 = arith.addf %11, %13 : vector<16x128xf32>
    %15 = vector.extract_strided_slice %14 {offsets = [0, 0], sizes = [16, 32], strides = [1, 1]} : vector<16x128xf32> to vector<16x32xf32>
    %16 = arith.negf %15 : vector<16x32xf32>
    %17 = math.exp %16 : vector<16x32xf32>
    %cst_12 = arith.constant 1.000000e+00 : f32
    %18 = vector.broadcast %cst_12 : f32 to vector<16x32xf32>
    %19 = arith.addf %18, %17 : vector<16x32xf32>
    %20 = arith.divf %18, %19 : vector<16x32xf32>
    %21 = vector.extract_strided_slice %14 {offsets = [0, 32], sizes = [16, 32], strides = [1, 1]} : vector<16x128xf32> to vector<16x32xf32>
    %22 = math.tanh %21 : vector<16x32xf32>
    %cst_13 = arith.constant 1.000000e+00 : f32
    %23 = vector.broadcast %cst_13 : f32 to vector<16x32xf32>
    %24 = arith.subf %23, %20 : vector<16x32xf32>
    %25 = arith.mulf %24, %22 : vector<16x32xf32>
    %cst_14 = arith.constant 0.000000e+00 : f32
    %26 = vector.broadcast %cst_14 : f32 to vector<16x32xf32>
    %27 = arith.maximumf %25, %26 : vector<16x32xf32>
    %c1_15 = arith.constant 1 : index
    %c0_16 = arith.constant 0 : index
    %28 = vector.load %arg4[%c1_15, %c0_16] : memref<3x128xf32, #tpu.memory_space<vmem>>, vector<1x32xf32>
    %29 = vector.broadcast %28 : vector<1x32xf32> to vector<16x32xf32>
    %30 = arith.mulf %27, %29 : vector<16x32xf32>
    %cst_17 = arith.constant dense<0.000000e+00> : vector<16xf32>
    %31 = vector.multi_reduction <add>, %30, %cst_17 [1] : vector<16x32xf32> to vector<16xf32>
    %32 = vector.shape_cast %31 : vector<16xf32> to vector<16x1xf32>
    %c2 = arith.constant 2 : index
    %c0_18 = arith.constant 0 : index
    %33 = vector.load %arg4[%c2, %c0_18] : memref<3x128xf32, #tpu.memory_space<vmem>>, vector<1x1xf32>
    %34 = vector.broadcast %33 : vector<1x1xf32> to vector<16x1xf32>
    %35 = arith.addf %32, %34 : vector<16x1xf32>
    %c0_19 = arith.constant 0 : index
    %c0_20 = arith.constant 0 : index
    %36 = vector.load %arg5[%c0_19, %c0_20] : memref<16x1xf32, #tpu.memory_space<vmem>>, vector<16x1xf32>
    tpu.vector_store %arg5[%c0_19, %c0_20], %35 {strides = array<i32>} : memref<16x1xf32, #tpu.memory_space<vmem>>, vector<16x1xf32>,
    return
  }
  func.func @transform_0(%arg0: i32) -> (i32, i32) {
    %c0_i32 = arith.constant 0 : i32
    %c0_i32_0 = arith.constant 0 : i32
    return %arg0, %c0_i32 : i32, i32
  }
  func.func @transform_1(%arg0: i32) -> (i32, i32) {
    %c0_i32 = arith.constant 0 : i32
    %c0_i32_0 = arith.constant 0 : i32
    %c0_i32_1 = arith.constant 0 : i32
    return %c0_i32, %c0_i32_0 : i32, i32
  }
  func.func @transform_2(%arg0: i32) -> (i32, i32, i32) {
    %c0_i32 = arith.constant 0 : i32
    %c0_i32_0 = arith.constant 0 : i32
    %c0_i32_1 = arith.constant 0 : i32
    %c0_i32_2 = arith.constant 0 : i32
    return %c0_i32, %c0_i32_0, %c0_i32_1 : i32, i32, i32
  }
  func.func @transform_3(%arg0: i32) -> (i32, i32) {
    %c0_i32 = arith.constant 0 : i32
    %c0_i32_0 = arith.constant 0 : i32
    %c0_i32_1 = arith.constant 0 : i32
    return %c0_i32, %c0_i32_0 : i32, i32
  }
  func.func @transform_4(%arg0: i32) -> (i32, i32) {
    %c0_i32 = arith.constant 0 : i32
    %c0_i32_0 = arith.constant 0 : i32
    return %arg0, %c0_i32 : i32, i32
  }
}

</mosaic_0001>

<llo_original>
// kernel: tpu_custom_call.1
$region0: #{tpu_custom_call.1}
  #allocation0 [shape = 'u32[]', space=smem, size = 0x4, offset = 0x4, fixed_abs, tag = 'smem constant byte address 0x4 - core index']
  #allocation1 [shape = 'u32[72,128]{1,0:T(1,128)}', space=vmem, size = 0x9000, scoped, tag = 'internal scratch']
  %s0 = inlined_call_operand.vmem [shape: f32[16,4], index: 0, kind: input, shape index: {}]
  %s1 = inlined_call_operand.vmem [shape: f32[16,16], index: 1, kind: input, shape index: {}]
  %s2 = inlined_call_operand.vmem [shape: bf16[2,4,128], index: 2, kind: input, shape index: {}]
  %s3 = inlined_call_operand.hbm [shape: f32[3,128], index: 3, kind: input, shape index: {}]
  %s4 = inlined_call_operand.vmem [shape: f32[16,1], index: 4, kind: output, shape index: {}]
  %s5 = sld [smem:[#allocation0]]
  $region30: #{tpu_custom_call.1} parent=0
    _
  %s7 = ssub.s32 1, %s5
  %s8 = scalar_select 0, %s7, %s5
  $region1: #{tpu_custom_call.1} parent=0
    #allocation2 [shape = 'u8[2048]{0}', space=vmem, size = 0x800, scoped, tag = 'input window, operand 3, single buffered']
    #allocation3 [shape = 's32[1]{0}', space=sflag, size = 0x4, scoped, tag = 'scoped memory for tpu_custom_call.1']
    %9 = vsyncpa [#allocation3], 0
    // Predicated region
    $region2: #{tpu_custom_call.1} parent=1 // pred_check
      _
    $region3: #{tpu_custom_call.1} parent=1 // pred_check_branch
      %11 = sbr.rel (0) target = $region5
    $region4: #{tpu_custom_call.1} parent=1 // pred_region
      _
    $region5: #{tpu_custom_call.1} parent=1 // pred_fallthru
      _
    // Predicated region
    $region6: #{tpu_custom_call.1} parent=1 // pred_check
      _
    $region7: #{tpu_custom_call.1} parent=1 // pred_check_branch
      %13 = sbr.rel (0) target = $region9
    $region8: #{tpu_custom_call.1} parent=1 // pred_region
      _
    $region9: #{tpu_custom_call.1} parent=1 // pred_fallthru
      _
    // Predicated region
    $region10: #{tpu_custom_call.1} parent=1 // pred_check
      _
    $region11: #{tpu_custom_call.1} parent=1 // pred_check_branch
      %15 = sbr.rel (0) target = $region13
    $region12: #{tpu_custom_call.1} parent=1 // pred_region
      _
    $region13: #{tpu_custom_call.1} parent=1 // pred_fallthru
      _
    // Predicated region
    $region14: #{tpu_custom_call.1} parent=1 // pred_check
      _
    $region15: #{tpu_custom_call.1} parent=1 // pred_check_branch
      %17 = sbr.rel (0) target = $region17
    $region16: #{tpu_custom_call.1} parent=1 // pred_region
      %19 = vsyncadd [#allocation3], 0
      %s21 = sshll.u32 %s3, 4
      %s22 = int_to_ptr.hbm [resolvable:$true] %s21
      %s23 = sshll.u32 [#allocation2], 4
      %s24 = int_to_ptr.vmem [resolvable:$true] %s23
      %26 = dma.hbm_to_vmem [thread:$0]  %s22, 64, %s24, [#allocation3]
    $region17: #{tpu_custom_call.1} parent=1 // pred_fallthru
      _
    // Predicated region
    $region18: #{tpu_custom_call.1} parent=1 // pred_check
      _
    $region19: #{tpu_custom_call.1} parent=1 // pred_check_branch
      %28 = sbr.rel (0) target = $region21
    $region20: #{tpu_custom_call.1} parent=1 // pred_region
      %30 = dma.done [#allocation3], 64
    $region21: #{tpu_custom_call.1} parent=1 // pred_fallthru
      _
    %v32 = vld [vmem:[%s0] sm:$0xff]
    %v33 = vld [vmem:[%s0 + $0x8] sm:$0xff]
    %v34 = vpack.c.bf16 %v33, %v32
    %v35 = vld [vmem:[%s1] sm:$0xff]
    %v36 = vld [vmem:[%s1 + $0x8] sm:$0xff]
    %vm37 = vcmask 130048
    %v39 = vsel %vm37, %v35, 0
    %v42 = vsel %vm37, %v36, 0
    %44 = vmatpush.msra.mxu0 0.0
    %45 = vmatpush.msra.mxu0 0.0
    %46 = vmatpush.msra.mxu0 0.0
    %47 = vmatpush.msra.mxu0 0.0
    %48 = vmatpush.msra.mxu0 0.0
    %49 = vmatpush.msra.mxu0 0.0
    %50 = vmatpush.msra.mxu0 0.0
    %51 = vmatpush.msra.mxu0 0.0
    %52 = vmatpush.msra.mxu0 0.0
    %53 = vmatpush.msra.mxu0 0.0
    %54 = vmatpush.msra.mxu0 0.0
    %55 = vmatpush.msra.mxu0 0.0
    %56 = vmatpush.msra.mxu0 0.0
    %57 = vmatpush.msra.mxu0 0.0
    %58 = vmatpush.msra.mxu0 %v33
    %59 = vmatpush.msra.mxu0 %v32
    %60 = vmatmul.f32.gmra.mxu0 %v39
    %v61 = vpop.f32.mrf.mxu0
    %v62 = vadd.f32 0.0, %v61
    %63 = vmatmul.f32.gmra.mxu0 %v42
    %v64 = vpop.f32.mrf.mxu0
    %v65 = vadd.f32 0.0, %v64
    %66 = vdwg.mxu0
    %v67 = vpack.c.bf16 %v65, %v62
    %v68 = vld [vmem:[%s2] sm:$0x3]
    %s69 = scalar_lea.vmem %s2, 2
    %v70 = vld [vmem:[%s69] sm:$0x3]
    %vm71 = vcmask 31744
    %v73 = vsel %vm71, %v67, 0
    %vm75 = vcmask 1041408
    %v77 = vsel %vm75, %v70, 0
    %79 = vmatpush.bf16.msra.mxu0 0
    %80 = vmatpush.bf16.msra.mxu0 0
    %81 = vmatpush.bf16.msra.mxu0 0
    %82 = vmatpush.bf16.msra.mxu0 0
    %83 = vmatpush.bf16.msra.mxu0 0
    %84 = vmatpush.bf16.msra.mxu0 0
    %85 = vmatpush.bf16.msra.mxu0 0
    %86 = vmatpush.bf16.msra.mxu0 %v77
    %87 = vmatmul.bf16.gmra.mxu0 %v73
    %v88 = vpop.f32.mrf.mxu0
    %v89 = vadd.f32 0.0, %v88
    %v90 = vpop.f32.mrf.mxu0
    %v91 = vadd.f32 0.0, %v90
    %92 = vdwg.mxu0
    %v94 = vsel %vm71, %v34, 0
    %v97 = vsel %vm75, %v68, 0
    %99 = vmatpush.bf16.msra.mxu0 0
    %100 = vmatpush.bf16.msra.mxu0 0
    %101 = vmatpush.bf16.msra.mxu0 0
    %102 = vmatpush.bf16.msra.mxu0 0
    %103 = vmatpush.bf16.msra.mxu0 0
    %104 = vmatpush.bf16.msra.mxu0 0
    %105 = vmatpush.bf16.msra.mxu0 0
    %106 = vmatpush.bf16.msra.mxu0 %v97
    %107 = vmatmul.bf16.gmra.mxu0 %v94
    %v108 = vpop.f32.mrf.mxu0
    %v109 = vadd.f32 %v89, %v108
    %v110 = vpop.f32.mrf.mxu0
    %v111 = vadd.f32 %v91, %v110
    %112 = vdwg.mxu0
    %v113 = vld [vmem:[#allocation2] sm:$0x1]
    %v114 = vperm.slane %v113, 0
    %v115 = vadd.f32 %v109, %v114
    %v116 = vadd.f32 %v111, %v114
    %v117 = vxor.u32 %v115, 2147483648
    %v118 = vxor.u32 %v116, 2147483648
    %v119 = vmul.f32 %v117, 1.442695
    %v120 = vpow.pop %v119
    %v121 = vmul.f32 %v118, 1.442695
    %v122 = vpow.pop %v121
    %v123 = vadd.f32 %v120, 1.0
    %v124 = vadd.f32 %v122, 1.0
    %v125 = vrcp.pop %v123
    %v126 = vmul.f32 %v123, %v125
    %v127 = vsub.f32 1.0, %v126
    %v128 = vmul.f32 %v125, %v127
    %v129 = vadd.f32 %v125, %v128
    %vm130 = vweird.f32 %v123
    %vm131 = vweird.f32 %v125
    %vm132 = vmor %vm130, %vm131
    %v133 = vsel %vm132, %v125, %v129
    %v134 = vand.u32 2147483647, %v123
    %vm135 = vcmp.eq.f32.partialorder %v134, 8.507059e+37
    %v136 = vand.u32 %v123, 2147483648
    %v137 = vor.u32 1.1754944e-38, %v136
    %v138 = vsel %vm135, %v137, %v133
    %v139 = vmul.f32 1.0, %v138
    %v140 = vrcp.pop %v124
    %v141 = vmul.f32 %v124, %v140
    %v142 = vsub.f32 1.0, %v141
    %v143 = vmul.f32 %v140, %v142
    %v144 = vadd.f32 %v140, %v143
    %vm145 = vweird.f32 %v124
    %vm146 = vweird.f32 %v140
    %vm147 = vmor %vm145, %vm146
    %v148 = vsel %vm147, %v140, %v144
    %v149 = vand.u32 2147483647, %v124
    %vm150 = vcmp.eq.f32.partialorder %v149, 8.507059e+37
    %v151 = vand.u32 %v124, 2147483648
    %v152 = vor.u32 1.1754944e-38, %v151
    %v153 = vsel %vm150, %v152, %v148
    %v154 = vmul.f32 1.0, %v153
    %v155 = vtanh.pop %v115
    %v156 = vtanh.pop %v116
    %v157 = vsub.f32 1.0, %v139
    %v158 = vsub.f32 1.0, %v154
    %161 = vrot.lane.b32.xlu0 %v155, 96
    %v162 = vpop.permute.xlu0 %161
    %163 = vrot.lane.b32.xlu0 %v156, 96
    %v164 = vpop.permute.xlu0 %163
    %v167 = vmul.f32 %v157, %v162
    %v168 = vmul.f32 %v158, %v164
    %v169 = vmax.f32 %v167, 0.0
    %v170 = vmax.f32 %v168, 0.0
    %v171 = vld [vmem:[#allocation2 + $0x1] sm:$0x1]
    %v172 = vperm.slane %v171, 0
    %v173 = vmul.f32 %v169, %v172
    %v174 = vmul.f32 %v170, %v172
    %vm175 = vcmask 261120
    %v176 = vsel %vm175, %v173, 0.0
    %177 = vadd.xlane.f32.xlu0 %v176
    %v178 = vpop.xlane.xlu0 %177
    %v179 = vsel %vm175, %v174, 0.0
    %180 = vadd.xlane.f32.xlu0 %v179
    %v181 = vpop.xlane.xlu0 %180
    %v182 = vld [vmem:[#allocation2 + $0x2] sm:$0x1]
    %v183 = vperm.slane %v182, 0
    %v184 = vadd.f32 %v178, %v183
    %v185 = vadd.f32 %v181, %v183
    %vm186 = vcmask 7168
    %187 = vst.msk [vmem:[%s4] sm:$0xff] %vm186, %v184
    %188 = vst.msk [vmem:[%s4 + $0x8] sm:$0xff] %vm186, %v185
    // Predicated region
    $region22: #{tpu_custom_call.1} parent=1 // pred_check
      _
    $region23: #{tpu_custom_call.1} parent=1 // pred_check_branch
      %190 = sbr.rel (0) target = $region25
    $region24: #{tpu_custom_call.1} parent=1 // pred_region
      _
    $region25: #{tpu_custom_call.1} parent=1 // pred_fallthru
      _
    // Predicated region
    $region26: #{tpu_custom_call.1} parent=1 // pred_check
      _
    $region27: #{tpu_custom_call.1} parent=1 // pred_check_branch
      %192 = sbr.rel (0) target = $region29
    $region28: #{tpu_custom_call.1} parent=1 // pred_region
      _
    $region29: #{tpu_custom_call.1} parent=1 // pred_fallthru
      _
    %193 = vsyncpa [#allocation3], 1

</llo_original>
